<compile_context>
chip_gen: v7x
topology: tpu7x:2x2x1
jax: 0.10.0
libtpu: 0.0.40
codegen_flags: <defaults>
</compile_context>

<pallas_src>
import math

import jax
import jax.numpy as jnp
from jax import lax
from jax.experimental import pallas as pl
from jax.experimental.pallas import tpu as pltpu


# ----------------------------------------------------------------------------
# Kernel factory (S / tile_s are compile-time Python ints)
# ----------------------------------------------------------------------------
def _make_attention_kernel(seq_len, tile_s):
    needs_mask = (seq_len % tile_s) != 0

    def kernel(x_ref, w_ref, b_ref, o_ref, num_acc, den_acc, xsum_acc):
        j = pl.program_id(1)

        @pl.when(j == 0)
        def _init():
            num_acc[...] = jnp.zeros_like(num_acc)
            den_acc[...] = jnp.zeros_like(den_acc)
            xsum_acc[...] = jnp.zeros_like(xsum_acc)

        x = x_ref[...]                             # (TB, TS, D), native dtype
        w = w_ref[...].astype(jnp.float32)         # (1, 1, D)
        b = b_ref[...].astype(jnp.float32)         # (1, TS, 1)

        if needs_mask:
            # Partial last S block: zero out the padded sequence positions so
            # garbage rows cannot contaminate the accumulators.
            s_idx = lax.broadcasted_iota(jnp.int32, (1, tile_s, 1), 1)
            valid = (j * tile_s + s_idx) < seq_len
            x = jnp.where(valid, x, jnp.zeros_like(x))

        # Scores with S kept on sublanes: (TB, TS, 1).  f32 accumulation, no
        # persistent f32 copy of x (promotion happens per-vreg in the product).
        e = jnp.sum(x * w, axis=-1, keepdims=True, dtype=jnp.float32)
        e = jnp.tanh(e + b)
        # exp without max-subtraction is safe ONLY because tanh bounds e to
        # [-1, 1]; keep this invariant if the activation ever changes.
        p = jnp.exp(e)                             # (TB, TS, 1), f32
        if needs_mask:
            p = jnp.where(valid, p, jnp.zeros_like(p))

        den_acc[...] += jnp.sum(p, axis=1)                         # (TB, 1)
        num_acc[...] += jnp.sum(x * p, axis=1)                     # (TB, D) f32
        xsum_acc[...] += jnp.sum(x, axis=1, dtype=jnp.float32)     # (TB, D)

        @pl.when(j == pl.num_programs(1) - 1)
        def _finalize():
            # torch: a = exp/den + 1e-10 (after divide)
            #   =>  out = num/den + 1e-10 * sum_s(x)
            out = num_acc[...] / den_acc[...] + 1e-10 * xsum_acc[...]
            o_ref[...] = out.astype(o_ref.dtype)

    return kernel


# ----------------------------------------------------------------------------
# VMEM budget & tile derivation
# ----------------------------------------------------------------------------
def _vmem_capacity_bytes():
    try:
        info = pltpu.get_tpu_info()
        cap = getattr(info, "vmem_capacity_bytes", None)
        if cap:
            return int(cap)
    except Exception:
        pass
    return 64 * 1024 * 1024  # conservative fallback (v7x per-TC physical)


def _round_down8(n):
    return max(8, (n // 8) * 8)


def _derive_tiles(B, S, D, itemsize, budget_bytes):
    """Pick (tile_b, tile_s) so double-buffered inputs + f32 temporaries +
    accumulators fit inside `budget_bytes` of VMEM."""
    d_lanes = max(128, ((D + 127) // 128) * 128)        # lane-padded D
    # per (row, seq-element): double-buffered x block + ~2 live f32 temporaries
    per_rs = d_lanes * (2 * itemsize + 2 * 4)
    # per row: 2 f32 accumulators + double-buffered output block + denominator
    per_r = d_lanes * (2 * 4 + 2 * itemsize) + 512

    def row_cost(ts):
        ts_pad = ((ts + 7) // 8) * 8
        return ts_pad * per_rs + per_r

    # Prefer the full sequence in one block (no tail masking); tile S only when
    # even an 8-row batch tile would not fit.
    if 8 * row_cost(S) <= budget_bytes:
        tile_s = S
    else:
        ts = int((budget_bytes // 8 - per_r) // per_rs)
        tile_s = min(_round_down8(ts), S)

    rows = int(budget_bytes // row_cost(tile_s))
    if rows >= B:
        tile_b = B
    else:
        tile_b = min(_round_down8(rows), B)

    # Megacore (v7x has 2 TensorCores): make sure the batch axis has >= 2 grid
    # blocks whenever B is large enough to split.
    if B >= 16 and tile_b >= B:
        tile_b = _round_down8(-(-B // 2))

    # Output block constraint: second-to-last dim multiple of 8 or == B.
    if tile_b != B and tile_b % 8 != 0:
        tile_b = _round_down8(tile_b)
    tile_b = max(1, min(tile_b, B))
    tile_s = max(1, min(tile_s, S))
    return tile_b, tile_s


# ----------------------------------------------------------------------------
# Wrapper
# ----------------------------------------------------------------------------
def attention_forward(params, x):
    """Matches Attention.forward: x (B, S, D) -> (B, D)."""
    B, S, D = x.shape
    itemsize = jnp.dtype(x.dtype).itemsize

    # Tiny parameters repacked once: w lane-major (1, 1, D); bias on sublanes
    # (1, S, 1) so it adds directly onto the (TB, S, 1) score tensor.
    w_row = params["weight"].reshape(1, 1, D)
    b = params.get("b")
    if b is None:                                    # bias=False  ==  zeros
        b = jnp.zeros((S,), jnp.float32)
    b_col = b.reshape(1, S, 1)

    # VMEM budget derived from the actual chip (v7x 64 MiB, v5e/v6e 128 MiB).
    vmem_cap = _vmem_capacity_bytes()
    vmem_limit = int(vmem_cap * 0.75)                # ~48 MiB v7x, ~96 MiB v6e
    budget = int(vmem_limit * 0.85)                  # headroom for Mosaic scratch

    tile_b, tile_s = _derive_tiles(B, S, D, itemsize, budget)
    grid = (pl.cdiv(B, tile_b), pl.cdiv(S, tile_s))

    cost = pl.CostEstimate(
        flops=int(5 * B * S * D),                    # score matvec + weighted sums
        transcendentals=int(2 * B * S),              # tanh + exp
        bytes_accessed=int(B * S * D * itemsize + B * D * itemsize + D * 4 + S * 4),
    )

    kernel = _make_attention_kernel(S, tile_s)

    return pl.pallas_call(
        kernel,
        out_shape=jax.ShapeDtypeStruct((B, D), x.dtype),
        grid_spec=pltpu.PrefetchScalarGridSpec(
            num_scalar_prefetch=0,
            grid=grid,
            in_specs=[
                pl.BlockSpec((tile_b, tile_s, D), lambda i, j: (i, j, 0)),
                pl.BlockSpec((1, 1, D), lambda i, j: (0, 0, 0)),
                pl.BlockSpec((1, tile_s, 1), lambda i, j: (0, j, 0)),
            ],
            out_specs=pl.BlockSpec((tile_b, D), lambda i, j: (i, 0)),
            scratch_shapes=[
                pltpu.VMEM((tile_b, D), jnp.float32),   # num  = sum_s exp(e) * x
                pltpu.VMEM((tile_b, 1), jnp.float32),   # den  = sum_s exp(e)
                pltpu.VMEM((tile_b, D), jnp.float32),   # xsum = sum_s x
            ],
        ),
        compiler_params=pltpu.CompilerParams(
            dimension_semantics=("parallel", "arbitrary"),
            vmem_limit_bytes=vmem_limit,
        ),
        cost_estimate=cost,
    )(x, w_row, b_col)


# ----------------------------------------------------------------------------
# Parameter init (matches the torch module)
# ----------------------------------------------------------------------------
def init_attention(key, sequence_length, dimensions, bias=True, dtype=jnp.float32):
    # nn.init.xavier_uniform_ on a (D, 1) weight: bound = sqrt(6 / (D + 1))
    bound = math.sqrt(6.0 / (dimensions + 1))
    weight = jax.random.uniform(key, (dimensions, 1), dtype,
                                minval=-bound, maxval=bound)
    b = jnp.zeros((sequence_length,), dtype)    # torch init: zeros; no-bias == zeros
    return {"weight": weight, "b": b, "bias": bias}


# ----------------------------------------------------------------------------
# Pure-JAX reference (mirrors the torch forward exactly)
# ----------------------------------------------------------------------------
def attention_ref(params, x):
    B, S, D = x.shape
    eij = (x.reshape(-1, D) @ params["weight"]).reshape(B, S)
    eij = eij + params["b"]
    eij = jnp.tanh(eij)
    a = jnp.exp(eij)
    a = a / jnp.sum(a, axis=1, keepdims=True) + 1e-10
    return jnp.sum(x * a[:, :, None], axis=1)


# ----------------------------------------------------------------------------
# Demo / smoke test
# ----------------------------------------------------------------------------
if __name__ == "__main__":
    key = jax.random.PRNGKey(0)
    k_param, k_bias, k_x = jax.random.split(key, 3)

    batch, seq, hidden = 2, 8, 32

    params = init_attention(k_param, seq, hidden)
    # Give the bias non-zero values so the bias path is actually exercised.
    params["b"] = 0.1 * jax.random.normal(k_bias, (seq,), jnp.float32)

    x = jax.random.normal(k_x, (batch, seq, hidden), jnp.float32)

    out = attention_forward(params, x)
    out = jax.block_until_ready(out)

    ref = attention_ref(params, x)
    assert out.shape == (batch, hidden), out.shape
    assert jnp.allclose(out, ref, atol=1e-4, rtol=1e-4), float(jnp.max(jnp.abs(out - ref)))

    print("KERNEL_OK")
</pallas_src>

<mosaic_0001>
module attributes {stable_mosaic.version = 11 : i64} {
  func.func @kernel(%arg0: i32, %arg1: i32, %arg2: memref<2x8x32xf32, #tpu.memory_space<vmem>>, %arg3: memref<1x1x32xf32, #tpu.memory_space<vmem>>, %arg4: memref<1x8x1xf32, #tpu.memory_space<vmem>>, %arg5: memref<2x32xf32, #tpu.memory_space<vmem>>, %arg6: memref<2x32xf32, #tpu.memory_space<vmem>>, %arg7: memref<2x1xf32, #tpu.memory_space<vmem>>, %arg8: memref<2x32xf32, #tpu.memory_space<vmem>>) attributes {dimension_semantics = [#tpu.dimension_semantics<parallel>, #tpu.dimension_semantics<arbitrary>], iteration_bounds = array<i64: 1, 1>, scalar_prefetch = 0 : i64, scratch_operands = 3 : i64, tpu.core_type = #tpu.core_type<tc>, window_params = [{transform_indices = @transform_0, window_bounds = array<i64: 2, 8, 32>}, {pipeline_mode = #tpu.pipeline_mode<synchronous>, transform_indices = @transform_1, window_bounds = array<i64: 1, 1, 32>}, {transform_indices = @transform_2, window_bounds = array<i64: 1, 8, 1>}, {transform_indices = @transform_3, window_bounds = array<i64: 2, 32>}]} {
    %c0_i32 = arith.constant 0 : i32
    %0 = arith.cmpi eq, %arg1, %c0_i32 : i32
    %1 = arith.extui %0 : i1 to i32
    %c0_i32_0 = arith.constant 0 : i32
    %2 = arith.cmpi ne, %1, %c0_i32_0 : i32
    scf.if %2 {
      %cst_26 = arith.constant 0.000000e+00 : f32
      %31 = vector.broadcast %cst_26 : f32 to vector<2x32xf32>
      %c0_27 = arith.constant 0 : index
      %c0_28 = arith.constant 0 : index
      %32 = vector.load %arg6[%c0_27, %c0_28] : memref<2x32xf32, #tpu.memory_space<vmem>>, vector<2x32xf32>
      tpu.vector_store %arg6[%c0_27, %c0_28], %31 {strides = array<i32>} : memref<2x32xf32, #tpu.memory_space<vmem>>, vector<2x32xf32>,
      %cst_29 = arith.constant 0.000000e+00 : f32
      %33 = vector.broadcast %cst_29 : f32 to vector<2x1xf32>
      %c0_30 = arith.constant 0 : index
      %c0_31 = arith.constant 0 : index
      %34 = vector.load %arg7[%c0_30, %c0_31] : memref<2x1xf32, #tpu.memory_space<vmem>>, vector<2x1xf32>
      tpu.vector_store %arg7[%c0_30, %c0_31], %33 {strides = array<i32>} : memref<2x1xf32, #tpu.memory_space<vmem>>, vector<2x1xf32>,
      %cst_32 = arith.constant 0.000000e+00 : f32
      %35 = vector.broadcast %cst_32 : f32 to vector<2x32xf32>
      %c0_33 = arith.constant 0 : index
      %c0_34 = arith.constant 0 : index
      %36 = vector.load %arg8[%c0_33, %c0_34] : memref<2x32xf32, #tpu.memory_space<vmem>>, vector<2x32xf32>
      tpu.vector_store %arg8[%c0_33, %c0_34], %35 {strides = array<i32>} : memref<2x32xf32, #tpu.memory_space<vmem>>, vector<2x32xf32>,
    } else {
    }
    %c0 = arith.constant 0 : index
    %c0_1 = arith.constant 0 : index
    %c0_2 = arith.constant 0 : index
    %3 = vector.load %arg2[%c0, %c0_1, %c0_2] : memref<2x8x32xf32, #tpu.memory_space<vmem>>, vector<2x8x32xf32>
    %c0_3 = arith.constant 0 : index
    %c0_4 = arith.constant 0 : index
    %c0_5 = arith.constant 0 : index
    %4 = vector.load %arg3[%c0_3, %c0_4, %c0_5] : memref<1x1x32xf32, #tpu.memory_space<vmem>>, vector<1x1x32xf32>
    %c0_6 = arith.constant 0 : index
    %c0_7 = arith.constant 0 : index
    %c0_8 = arith.constant 0 : index
    %5 = vector.load %arg4[%c0_6, %c0_7, %c0_8] : memref<1x8x1xf32, #tpu.memory_space<vmem>>, vector<1x8x1xf32>
    %6 = vector.broadcast %4 : vector<1x1x32xf32> to vector<2x8x32xf32>
    %7 = arith.mulf %3, %6 : vector<2x8x32xf32>
    %cst = arith.constant dense<0.000000e+00> : vector<2x8xf32>
    %8 = vector.multi_reduction <add>, %7, %cst [2] : vector<2x8x32xf32> to vector<2x8xf32>
    %9 = vector.shape_cast %8 : vector<2x8xf32> to vector<2x8x1xf32>
    %10 = vector.broadcast %5 : vector<1x8x1xf32> to vector<2x8x1xf32>
    %11 = arith.addf %9, %10 : vector<2x8x1xf32>
    %12 = math.tanh %11 : vector<2x8x1xf32>
    %13 = math.exp %12 : vector<2x8x1xf32>
    %c0_9 = arith.constant 0 : index
    %c0_10 = arith.constant 0 : index
    %14 = vector.load %arg7[%c0_9, %c0_10] : memref<2x1xf32, #tpu.memory_space<vmem>>, vector<2x1xf32>
    %cst_11 = arith.constant dense<0.000000e+00> : vector<2x1xf32>
    %15 = vector.multi_reduction <add>, %13, %cst_11 [1] : vector<2x8x1xf32> to vector<2x1xf32>
    %16 = arith.addf %14, %15 : vector<2x1xf32>
    %c0_12 = arith.constant 0 : index
    %c0_13 = arith.constant 0 : index
    %17 = vector.load %arg7[%c0_12, %c0_13] : memref<2x1xf32, #tpu.memory_space<vmem>>, vector<2x1xf32>
    tpu.vector_store %arg7[%c0_12, %c0_13], %16 {strides = array<i32>} : memref<2x1xf32, #tpu.memory_space<vmem>>, vector<2x1xf32>,
    %c0_14 = arith.constant 0 : index
    %c0_15 = arith.constant 0 : index
    %18 = vector.load %arg6[%c0_14, %c0_15] : memref<2x32xf32, #tpu.memory_space<vmem>>, vector<2x32xf32>
    %19 = vector.broadcast %13 : vector<2x8x1xf32> to vector<2x8x32xf32>
    %20 = arith.mulf %3, %19 : vector<2x8x32xf32>
    %cst_16 = arith.constant dense<0.000000e+00> : vector<2x32xf32>
    %21 = vector.multi_reduction <add>, %20, %cst_16 [1] : vector<2x8x32xf32> to vector<2x32xf32>
    %22 = arith.addf %18, %21 : vector<2x32xf32>
    %c0_17 = arith.constant 0 : index
    %c0_18 = arith.constant 0 : index
    %23 = vector.load %arg6[%c0_17, %c0_18] : memref<2x32xf32, #tpu.memory_space<vmem>>, vector<2x32xf32>
    tpu.vector_store %arg6[%c0_17, %c0_18], %22 {strides = array<i32>} : memref<2x32xf32, #tpu.memory_space<vmem>>, vector<2x32xf32>,
    %c0_19 = arith.constant 0 : index
    %c0_20 = arith.constant 0 : index
    %24 = vector.load %arg8[%c0_19, %c0_20] : memref<2x32xf32, #tpu.memory_space<vmem>>, vector<2x32xf32>
    %cst_21 = arith.constant dense<0.000000e+00> : vector<2x32xf32>
    %25 = vector.multi_reduction <add>, %3, %cst_21 [1] : vector<2x8x32xf32> to vector<2x32xf32>
    %26 = arith.addf %24, %25 : vector<2x32xf32>
    %c0_22 = arith.constant 0 : index
    %c0_23 = arith.constant 0 : index
    %27 = vector.load %arg8[%c0_22, %c0_23] : memref<2x32xf32, #tpu.memory_space<vmem>>, vector<2x32xf32>
    tpu.vector_store %arg8[%c0_22, %c0_23], %26 {strides = array<i32>} : memref<2x32xf32, #tpu.memory_space<vmem>>, vector<2x32xf32>,
    %c0_i32_24 = arith.constant 0 : i32
    %28 = arith.cmpi eq, %arg1, %c0_i32_24 : i32
    %29 = arith.extui %28 : i1 to i32
    %c0_i32_25 = arith.constant 0 : i32
    %30 = arith.cmpi ne, %29, %c0_i32_25 : i32
    scf.if %30 {
      %c0_26 = arith.constant 0 : index
      %c0_27 = arith.constant 0 : index
      %31 = vector.load %arg6[%c0_26, %c0_27] : memref<2x32xf32, #tpu.memory_space<vmem>>, vector<2x32xf32>
      %c0_28 = arith.constant 0 : index
      %c0_29 = arith.constant 0 : index
      %32 = vector.load %arg7[%c0_28, %c0_29] : memref<2x1xf32, #tpu.memory_space<vmem>>, vector<2x1xf32>
      %33 = vector.broadcast %32 : vector<2x1xf32> to vector<2x32xf32>
      %34 = arith.divf %31, %33 : vector<2x32xf32>
      %c0_30 = arith.constant 0 : index
      %c0_31 = arith.constant 0 : index
      %35 = vector.load %arg8[%c0_30, %c0_31] : memref<2x32xf32, #tpu.memory_space<vmem>>, vector<2x32xf32>
      %cst_32 = arith.constant 1.000000e-10 : f32
      %36 = vector.broadcast %cst_32 : f32 to vector<2x32xf32>
      %37 = arith.mulf %36, %35 : vector<2x32xf32>
      %38 = arith.addf %34, %37 : vector<2x32xf32>
      %c0_33 = arith.constant 0 : index
      %c0_34 = arith.constant 0 : index
      %39 = vector.load %arg5[%c0_33, %c0_34] : memref<2x32xf32, #tpu.memory_space<vmem>>, vector<2x32xf32>
      tpu.vector_store %arg5[%c0_33, %c0_34], %38 {strides = array<i32>} : memref<2x32xf32, #tpu.memory_space<vmem>>, vector<2x32xf32>,
    } else {
    }
    return
  }
  func.func @transform_0(%arg0: i32, %arg1: i32) -> (i32, i32, i32) {
    %c0_i32 = arith.constant 0 : i32
    %c0_i32_0 = arith.constant 0 : i32
    return %arg0, %arg1, %c0_i32 : i32, i32, i32
  }
  func.func @transform_1(%arg0: i32, %arg1: i32) -> (i32, i32, i32) {
    %c0_i32 = arith.constant 0 : i32
    %c0_i32_0 = arith.constant 0 : i32
    %c0_i32_1 = arith.constant 0 : i32
    %c0_i32_2 = arith.constant 0 : i32
    return %c0_i32, %c0_i32_0, %c0_i32_1 : i32, i32, i32
  }
  func.func @transform_2(%arg0: i32, %arg1: i32) -> (i32, i32, i32) {
    %c0_i32 = arith.constant 0 : i32
    %c0_i32_0 = arith.constant 0 : i32
    %c0_i32_1 = arith.constant 0 : i32
    return %c0_i32, %arg1, %c0_i32_0 : i32, i32, i32
  }
  func.func @transform_3(%arg0: i32, %arg1: i32) -> (i32, i32) {
    %c0_i32 = arith.constant 0 : i32
    %c0_i32_0 = arith.constant 0 : i32
    return %arg0, %c0_i32 : i32, i32
  }
}

</mosaic_0001>

<llo_original>
// kernel: tpu_custom_call.1
$region0: #{tpu_custom_call.1}
  #allocation0 [shape = 'u32[]', space=smem, size = 0x4, offset = 0x4, fixed_abs, tag = 'smem constant byte address 0x4 - core index']
  #allocation1 [shape = 'u32[144,128]{1,0:T(1,128)}', space=vmem, size = 0x12000, scoped, tag = 'internal scratch']
  #allocation2 [shape = 'f32[2,32]{1,0:T(2,128)}', space=vmem, size = 0x400, scoped, tag = 'scratch operand']
  #allocation3 [shape = 'f32[2,1]{1,0:T(2,128)}', space=vmem, size = 0x400, scoped, tag = 'scratch operand']
  #allocation4 [shape = 'f32[2,32]{1,0:T(2,128)}', space=vmem, size = 0x400, scoped, tag = 'scratch operand']
  %s0 = inlined_call_operand.hbm [shape: f32[2,8,32], index: 0, kind: input, shape index: {}]
  %s1 = inlined_call_operand.vmem [shape: f32[1,1,32], index: 1, kind: input, shape index: {}]
  %s2 = inlined_call_operand.vmem [shape: f32[1,8,1], index: 2, kind: input, shape index: {}]
  %s3 = inlined_call_operand.hbm [shape: f32[2,32], index: 3, kind: output, shape index: {}]
  %s4 = sld [smem:[#allocation0]]
  $region34: #{tpu_custom_call.1} parent=0
    _
  %s6 = ssub.s32 1, %s4
  %s7 = scalar_select 0, %s6, %s4
  $region1: #{tpu_custom_call.1} parent=0
    #allocation5 [shape = 'u8[8192]{0}', space=vmem, size = 0x2000, scoped, tag = 'input window, operand 0, single buffered']
    #allocation6 [shape = 's32[1]{0}', space=sflag, size = 0x4, scoped, tag = 'scoped memory for tpu_custom_call.1']
    #allocation7 [shape = 's32[1]{0}', space=sflag, size = 0x4, scoped, tag = 'scoped memory for tpu_custom_call.1']
    #allocation8 [shape = 'u8[1024]{0}', space=vmem, size = 0x400, scoped, tag = 'output window, operand 0, single buffered']
    %8 = vsyncpa [#allocation6], 0
    %9 = vsyncpa [#allocation7], 0
    // Predicated region
    $region2: #{tpu_custom_call.1} parent=1 // pred_check
      _
    $region3: #{tpu_custom_call.1} parent=1 // pred_check_branch
      %11 = sbr.rel (0) target = $region5
    $region4: #{tpu_custom_call.1} parent=1 // pred_region
      %s13 = ssub.s32 256, 256
      %14 = vsyncadd [#allocation6], %s13
      %s15 = sshll.u32 [#allocation5], 4
      %s16 = int_to_ptr.vmem [resolvable:$true] %s15
      %21 = dma.hbm_to_vmem [thread:$0]  %s0, 256, %s16, [#allocation6], 128, 128, 8
    $region5: #{tpu_custom_call.1} parent=1 // pred_fallthru
      _
    // Predicated region
    $region6: #{tpu_custom_call.1} parent=1 // pred_check
      _
    $region7: #{tpu_custom_call.1} parent=1 // pred_check_branch
      %23 = sbr.rel (0) target = $region9
    $region8: #{tpu_custom_call.1} parent=1 // pred_region
      _
    $region9: #{tpu_custom_call.1} parent=1 // pred_fallthru
      _
    // Predicated region
    $region10: #{tpu_custom_call.1} parent=1 // pred_check
      _
    $region11: #{tpu_custom_call.1} parent=1 // pred_check_branch
      %25 = sbr.rel (0) target = $region13
    $region12: #{tpu_custom_call.1} parent=1 // pred_region
      _
    $region13: #{tpu_custom_call.1} parent=1 // pred_fallthru
      _
    // Predicated region
    $region14: #{tpu_custom_call.1} parent=1 // pred_check
      _
    $region15: #{tpu_custom_call.1} parent=1 // pred_check_branch
      %27 = sbr.rel (0) target = $region17
    $region16: #{tpu_custom_call.1} parent=1 // pred_region
      %28 = dma.done [#allocation6], 256
    $region17: #{tpu_custom_call.1} parent=1 // pred_fallthru
      _
    %p29 = scmp.eq.s32.totalorder 0, 0
    // Predicated region
    $region18: #{tpu_custom_call.1} parent=1 // pred_check
      %p30 = pneg %p29
    $region19: #{tpu_custom_call.1} parent=1 // pred_check_branch
      %32 = sbr.rel (%p30) target = $region21
    $region20: #{tpu_custom_call.1} parent=1 // pred_region
      %vm33 = vcmask 254976
      %34 = vst.msk [vmem:[#allocation2] sm:$0x3] %vm33, 0.0
      %vm35 = vcmask 1024
      %36 = vst.msk [vmem:[#allocation3] sm:$0x3] %vm35, 0.0
      %37 = vst.msk [vmem:[#allocation4] sm:$0x3] %vm33, 0.0
    $region21: #{tpu_custom_call.1} parent=1 // pred_fallthru
      _
    %v38 = vld [vmem:[#allocation5] sm:$0xff]
    %v39 = vld [vmem:[#allocation5 + $0x8] sm:$0xff]
    %v40 = vld [vmem:[%s1] sm:$0x1]
    %v41 = vld [vmem:[%s2] sm:$0xff]
    %v43 = vlaneseq
    %v44 = vshrl.u32 %v43, 7
    %v45 = vsub.s32 0, %v44
    %v46 = vrot.slane %v40, %v45
    %v48 = vmul.f32 %v38, %v46
    %v49 = vmul.f32 %v39, %v46
    %vm50 = vcmask 261120
    %v51 = vsel %vm50, %v48, 0.0
    %52 = vadd.xlane.f32.xlu0 %v51
    %v53 = vpop.xlane.xlu0 %52
    %v54 = vsel %vm50, %v49, 0.0
    %55 = vadd.xlane.f32.xlu0 %v54
    %v56 = vpop.xlane.xlu0 %55
    %v57 = vadd.f32 %v53, %v41
    %v58 = vadd.f32 %v56, %v41
    %v59 = vtanh.pop %v57
    %v60 = vtanh.pop %v58
    %v61 = vmul.f32 %v59, 1.442695
    %v62 = vpow.pop %v61
    %v63 = vmul.f32 %v60, 1.442695
    %v64 = vpow.pop %v63
    %v65 = vld [vmem:[#allocation3] sm:$0x3]
    %vm66 = vcmask 7168
    %v67 = vsel %vm66, %v62, 0.0
    %v68 = vrot.slane %v67, 4
    %v69 = vadd.f32 %v67, %v68
    %v70 = vrot.slane %v69, 2
    %v71 = vadd.f32 %v69, %v70
    %v72 = vrot.slane %v71, 1
    %v73 = vadd.f32 %v71, %v72
    %v74 = vsel %vm66, %v64, 0.0
    %v75 = vrot.slane %v74, 4
    %v76 = vadd.f32 %v74, %v75
    %v77 = vrot.slane %v76, 2
    %v78 = vadd.f32 %v76, %v77
    %v79 = vrot.slane %v78, 1
    %v80 = vadd.f32 %v78, %v79
    %vm83 = vcmask 1041409
    %v84 = vsel %vm83, %v80, %v73
    %v86 = vadd.f32 %v65, %v84
    %vm87 = vcmask 1024
    %88 = vst.msk [vmem:[#allocation3] sm:$0x3] %vm87, %v86
    %v89 = vld [vmem:[#allocation2] sm:$0x3]
    %91 = vset.pattern.permute.xlu0 0
    %92 = vperm.xlu0 %91, %v62
    %v93 = vpop.permute.xlu0 %92
    %96 = vset.pattern.permute.xlu0 0
    %97 = vperm.xlu0 %96, %v64
    %v98 = vpop.permute.xlu0 %97
    %v100 = vmul.f32 %v38, %v93
    %v101 = vmul.f32 %v39, %v98
    %v102 = vsel %vm50, %v100, 0.0
    %v103 = vrot.slane %v102, 4
    %v104 = vadd.f32 %v102, %v103
    %v105 = vrot.slane %v104, 2
    %v106 = vadd.f32 %v104, %v105
    %v107 = vrot.slane %v106, 1
    %v108 = vadd.f32 %v106, %v107
    %v109 = vsel %vm50, %v101, 0.0
    %v110 = vrot.slane %v109, 4
    %v111 = vadd.f32 %v109, %v110
    %v112 = vrot.slane %v111, 2
    %v113 = vadd.f32 %v111, %v112
    %v114 = vrot.slane %v113, 1
    %v115 = vadd.f32 %v113, %v114
    %v118 = vsel %vm83, %v115, %v108
    %v120 = vadd.f32 %v89, %v118
    %vm121 = vcmask 254976
    %122 = vst.msk [vmem:[#allocation2] sm:$0x3] %vm121, %v120
    %v123 = vld [vmem:[#allocation4] sm:$0x3]
    %v124 = vsel %vm50, %v38, 0.0
    %v125 = vrot.slane %v124, 4
    %v126 = vadd.f32 %v124, %v125
    %v127 = vrot.slane %v126, 2
    %v128 = vadd.f32 %v126, %v127
    %v129 = vrot.slane %v128, 1
    %v130 = vadd.f32 %v128, %v129
    %v131 = vsel %vm50, %v39, 0.0
    %v132 = vrot.slane %v131, 4
    %v133 = vadd.f32 %v131, %v132
    %v134 = vrot.slane %v133, 2
    %v135 = vadd.f32 %v133, %v134
    %v136 = vrot.slane %v135, 1
    %v137 = vadd.f32 %v135, %v136
    %v140 = vsel %vm83, %v137, %v130
    %v142 = vadd.f32 %v123, %v140
    %143 = vst.msk [vmem:[#allocation4] sm:$0x3] %vm121, %v142
    // Predicated region
    $region22: #{tpu_custom_call.1} parent=1 // pred_check
      %p144 = pneg %p29
    $region23: #{tpu_custom_call.1} parent=1 // pred_check_branch
      %146 = sbr.rel (%p144) target = $region25
    $region24: #{tpu_custom_call.1} parent=1 // pred_region
      %v147 = vld [vmem:[#allocation2] sm:$0x3]
      %v148 = vld [vmem:[#allocation3] sm:$0x3]
      %150 = vset.pattern.permute.xlu0 0
      %151 = vperm.xlu0 %150, %v148
      %v152 = vpop.permute.xlu0 %151
      %v154 = vrcp.pop %v152
      %v155 = vmul.f32 %v147, %v154
      %v156 = vld [vmem:[#allocation4] sm:$0x3]
      %v157 = vmul.f32 %v156, 1e-10
      %v158 = vadd.f32 %v155, %v157
      %159 = vst.msk [vmem:[#allocation8] sm:$0x3] %vm121, %v158
    $region25: #{tpu_custom_call.1} parent=1 // pred_fallthru
      _
    // Predicated region
    $region26: #{tpu_custom_call.1} parent=1 // pred_check
      _
    $region27: #{tpu_custom_call.1} parent=1 // pred_check_branch
      %161 = sbr.rel (0) target = $region29
    $region28: #{tpu_custom_call.1} parent=1 // pred_region
      %s163 = ssub.s32 32, 32
      %164 = vsyncadd [#allocation7], %s163
      %s166 = sshll.u32 [#allocation8], 4
      %s167 = int_to_ptr.vmem [resolvable:$true] %s166
      %169 = dma.vmem_to_hbm [thread:$0]  %s167, 32, %s3, [#allocation7]
    $region29: #{tpu_custom_call.1} parent=1 // pred_fallthru
      _
    // Predicated region
    $region30: #{tpu_custom_call.1} parent=1 // pred_check
      _
    $region31: #{tpu_custom_call.1} parent=1 // pred_check_branch
      %171 = sbr.rel (0) target = $region33
    $region32: #{tpu_custom_call.1} parent=1 // pred_region
      %172 = dma.done [#allocation7], 32
    $region33: #{tpu_custom_call.1} parent=1 // pred_fallthru
      _
    %173 = vsyncpa [#allocation6], 1
    %174 = vsyncpa [#allocation7], 1

</llo_original>
